<compile_context>
chip_gen: v5e
topology: v5e:2x2
jax: 0.10.0
libtpu: 0.0.40
codegen_flags: <defaults>
</compile_context>

<pallas_src>
import jax
import jax.numpy as jnp
from jax.experimental import pallas as pl
from jax.experimental.pallas import tpu as pltpu

LANE = 128          # lane (last-dim) granularity
SUBL = 8            # sublane granularity
HP = 128            # padded hidden width (canonical MXU contraction dim)
OUT_PAD = 8         # padded output rows (sublane multiple; real rows = 4)
MAX_TILE_B = 2048   # batch lanes per grid step (amortizes ~0.35us per-step overhead)

D_IN = 1
D_H = 10
D_OUT = 4


def _round_up(n, m):
    return ((n + m - 1) // m) * m


def _pad2d(x, rows, cols):
    r, c = x.shape
    return jnp.pad(x, ((0, rows - r), (0, cols - c)))


# ------------------------------------------------------------------
# Pallas kernel: whole MLP fused (VPU layer-1, MXU layers 2/3, ReLUs, biases)
# ------------------------------------------------------------------
def mlp_kernel(x_ref, w1_ref, b1_ref, w2_ref, b2_ref, w3_ref, b3_ref, o_ref):
    # Batch is in lanes; features/hidden are in sublanes.
    x = x_ref[...]                                               # (1, T) lane-dense

    # Layer 1: fan_in == 1 -> pure VPU broadcast multiply-add, no MXU.
    h1 = jnp.maximum(w1_ref[...] * x + b1_ref[...], 0.0)        # (HP,1)*(1,T)+(HP,1) -> (HP,T)

    # Layer 2: canonical (128,128)@(128,T) MXU matmul, f32 accumulation.
    h2 = jnp.dot(w2_ref[...], h1, preferred_element_type=jnp.float32) + b2_ref[...]
    h2 = jnp.maximum(h2, 0.0)                                    # (HP, T)

    # Layer 3: (8,128)@(128,T) -> lane-dense (8, T) output (rows 4..7 are zero padding).
    o_ref[...] = jnp.dot(w3_ref[...], h2, preferred_element_type=jnp.float32) + b3_ref[...]


# ------------------------------------------------------------------
# One-time parameter padding (constant across forward calls)
# ------------------------------------------------------------------
def prepare_params(params):
    # Params are in PyTorch layout: W is (fan_out, fan_in), b is (fan_out,).
    w1, b1, w2, b2, w3, b3 = params
    w1_p = _pad2d(w1.astype(jnp.float32), HP, D_IN)                 # (128, 1)
    b1_p = _pad2d(b1.astype(jnp.float32)[:, None], HP, 1)           # (128, 1)
    w2_p = _pad2d(w2.astype(jnp.float32), HP, HP)                   # (128, 128)
    b2_p = _pad2d(b2.astype(jnp.float32)[:, None], HP, 1)           # (128, 1)
    w3_p = _pad2d(w3.astype(jnp.float32), OUT_PAD, HP)              # (8, 128)
    b3_p = _pad2d(b3.astype(jnp.float32)[:, None], OUT_PAD, 1)      # (8, 1)
    return (w1_p, b1_p, w2_p, b2_p, w3_p, b3_p)


# ------------------------------------------------------------------
# Wrapper: batch tiling + pallas_call
# ------------------------------------------------------------------
@jax.jit
def parameter_estimator_forward(x, padded_params):
    """x: (B, 1) float32 -> (B, 4) float32, matching the PyTorch forward semantics."""
    w1_p, b1_p, w2_p, b2_p, w3_p, b3_p = padded_params
    B = x.shape[0]

    tile_b = min(MAX_TILE_B, _round_up(B, LANE))   # small batches: single tile
    b_pad = _round_up(B, tile_b)
    grid = (b_pad // tile_b,)

    # (B, 1) -> (1, B) is a free reshape of contiguous data; zero-pad the batch lanes.
    x_p = jnp.pad(x.astype(jnp.float32).reshape(1, B), ((0, 0), (0, b_pad - B)))

    out_p = pl.pallas_call(
        mlp_kernel,
        out_shape=jax.ShapeDtypeStruct((OUT_PAD, b_pad), jnp.float32),
        grid=grid,
        in_specs=[
            pl.BlockSpec((1, tile_b), lambda i: (0, i)),        # x tile (lane-dense)
            pl.BlockSpec((HP, D_IN), lambda i: (0, 0)),         # w1 (VMEM-resident)
            pl.BlockSpec((HP, 1), lambda i: (0, 0)),            # b1
            pl.BlockSpec((HP, HP), lambda i: (0, 0)),           # w2
            pl.BlockSpec((HP, 1), lambda i: (0, 0)),            # b2
            pl.BlockSpec((OUT_PAD, HP), lambda i: (0, 0)),      # w3
            pl.BlockSpec((OUT_PAD, 1), lambda i: (0, 0)),       # b3
        ],
        out_specs=pl.BlockSpec((OUT_PAD, tile_b), lambda i: (0, i)),
        compiler_params=pltpu.CompilerParams(
            dimension_semantics=("parallel",),                  # megacore-shardable batch axis
        ),
    )(x_p, w1_p, b1_p, w2_p, b2_p, w3_p, b3_p)

    # Drop padded output rows / batch lanes and transpose back to (B, 4).
    return out_p[:D_OUT, :B].T


# ------------------------------------------------------------------
# Deterministic parameter init (PyTorch nn.Linear-style uniform fan-in init)
# ------------------------------------------------------------------
def init_params(key):
    def linear_init(key, fan_in, fan_out):
        kw, kb = jax.random.split(key)
        bound = 1.0 / jnp.sqrt(jnp.float32(fan_in))
        # PyTorch layout: weight is (fan_out, fan_in), forward is x @ W.T + b.
        w = jax.random.uniform(kw, (fan_out, fan_in), jnp.float32, -bound, bound)
        b = jax.random.uniform(kb, (fan_out,), jnp.float32, -bound, bound)
        return w, b

    k1, k2, k3 = jax.random.split(key, 3)
    w1, b1 = linear_init(k1, D_IN, D_H)
    w2, b2 = linear_init(k2, D_H, D_H)
    w3, b3 = linear_init(k3, D_H, D_OUT)
    return (w1, b1, w2, b2, w3, b3)


# Pure-JAX reference (PyTorch semantics) for a sanity check.
def reference_forward(x, params):
    w1, b1, w2, b2, w3, b3 = params
    h1 = jnp.maximum(x @ w1.T + b1, 0.0)
    h2 = jnp.maximum(h1 @ w2.T + b2, 0.0)
    return h2 @ w3.T + b3


if __name__ == "__main__":
    key = jax.random.PRNGKey(0)
    kp, kx = jax.random.split(key)

    params = init_params(kp)
    padded_params = prepare_params(params)   # done once, outside the hot path

    # Small batch of scalar inputs, shape (B, 1) as nn.Linear(1, 10) expects.
    x = jax.random.normal(kx, (2, 1), dtype=jnp.float32)

    out = parameter_estimator_forward(x, padded_params)
    out = jax.block_until_ready(out)

    ref = reference_forward(x, params)
    assert out.shape == (2, 4), out.shape
    assert jnp.allclose(out, ref, atol=1e-5, rtol=1e-5), (out, ref)

    print("KERNEL_OK")
</pallas_src>

<mosaic_0001>
module attributes {stable_mosaic.version = 11 : i64} {
  func.func @mlp_kernel(%arg0: i32, %arg1: memref<1x128xf32, #tpu.memory_space<vmem>>, %arg2: memref<128x1xf32, #tpu.memory_space<vmem>>, %arg3: memref<128x1xf32, #tpu.memory_space<vmem>>, %arg4: memref<128x128xf32, #tpu.memory_space<vmem>>, %arg5: memref<128x1xf32, #tpu.memory_space<vmem>>, %arg6: memref<8x128xf32, #tpu.memory_space<vmem>>, %arg7: memref<8x1xf32, #tpu.memory_space<vmem>>, %arg8: memref<8x128xf32, #tpu.memory_space<vmem>>) attributes {dimension_semantics = [#tpu.dimension_semantics<parallel>], iteration_bounds = array<i64: 1>, scalar_prefetch = 0 : i64, scratch_operands = 0 : i64, tpu.core_type = #tpu.core_type<tc>, window_params = [{transform_indices = @transform_0, window_bounds = array<i64: 1, 128>}, {pipeline_mode = #tpu.pipeline_mode<synchronous>, transform_indices = @transform_1, window_bounds = array<i64: 128, 1>}, {pipeline_mode = #tpu.pipeline_mode<synchronous>, transform_indices = @transform_2, window_bounds = array<i64: 128, 1>}, {pipeline_mode = #tpu.pipeline_mode<synchronous>, transform_indices = @transform_3, window_bounds = array<i64: 128, 128>}, {pipeline_mode = #tpu.pipeline_mode<synchronous>, transform_indices = @transform_4, window_bounds = array<i64: 128, 1>}, {pipeline_mode = #tpu.pipeline_mode<synchronous>, transform_indices = @transform_5, window_bounds = array<i64: 8, 128>}, {pipeline_mode = #tpu.pipeline_mode<synchronous>, transform_indices = @transform_6, window_bounds = array<i64: 8, 1>}, {transform_indices = @transform_7, window_bounds = array<i64: 8, 128>}]} {
    %c0 = arith.constant 0 : index
    %c0_0 = arith.constant 0 : index
    %0 = vector.load %arg1[%c0, %c0_0] : memref<1x128xf32, #tpu.memory_space<vmem>>, vector<1x128xf32>
    %c0_1 = arith.constant 0 : index
    %c0_2 = arith.constant 0 : index
    %1 = vector.load %arg2[%c0_1, %c0_2] : memref<128x1xf32, #tpu.memory_space<vmem>>, vector<128x1xf32>
    %2 = vector.broadcast %1 : vector<128x1xf32> to vector<128x128xf32>
    %3 = vector.broadcast %0 : vector<1x128xf32> to vector<128x128xf32>
    %4 = arith.mulf %2, %3 : vector<128x128xf32>
    %c0_3 = arith.constant 0 : index
    %c0_4 = arith.constant 0 : index
    %5 = vector.load %arg3[%c0_3, %c0_4] : memref<128x1xf32, #tpu.memory_space<vmem>>, vector<128x1xf32>
    %6 = vector.broadcast %5 : vector<128x1xf32> to vector<128x128xf32>
    %7 = arith.addf %4, %6 : vector<128x128xf32>
    %cst = arith.constant 0.000000e+00 : f32
    %8 = vector.broadcast %cst : f32 to vector<128x128xf32>
    %9 = arith.maximumf %7, %8 : vector<128x128xf32>
    %c0_5 = arith.constant 0 : index
    %c0_6 = arith.constant 0 : index
    %10 = vector.load %arg4[%c0_5, %c0_6] : memref<128x128xf32, #tpu.memory_space<vmem>>, vector<128x128xf32>
    %cst_7 = arith.constant dense<0.000000e+00> : vector<128x128xf32>
    %11 = tpu.matmul %10, %9, %cst_7 {dimension_numbers = #tpu.dot_dimension_numbers<[1], [0], [0], [1], [0, 0, 1, 1], [], []>} : vector<128x128xf32>, vector<128x128xf32>, vector<128x128xf32> -> vector<128x128xf32>
    %c0_8 = arith.constant 0 : index
    %c0_9 = arith.constant 0 : index
    %12 = vector.load %arg5[%c0_8, %c0_9] : memref<128x1xf32, #tpu.memory_space<vmem>>, vector<128x1xf32>
    %13 = vector.broadcast %12 : vector<128x1xf32> to vector<128x128xf32>
    %14 = arith.addf %11, %13 : vector<128x128xf32>
    %cst_10 = arith.constant 0.000000e+00 : f32
    %15 = vector.broadcast %cst_10 : f32 to vector<128x128xf32>
    %16 = arith.maximumf %14, %15 : vector<128x128xf32>
    %c0_11 = arith.constant 0 : index
    %c0_12 = arith.constant 0 : index
    %17 = vector.load %arg6[%c0_11, %c0_12] : memref<8x128xf32, #tpu.memory_space<vmem>>, vector<8x128xf32>
    %cst_13 = arith.constant dense<0.000000e+00> : vector<8x128xf32>
    %18 = tpu.matmul %17, %16, %cst_13 {dimension_numbers = #tpu.dot_dimension_numbers<[1], [0], [0], [1], [0, 0, 1, 1], [], []>} : vector<8x128xf32>, vector<128x128xf32>, vector<8x128xf32> -> vector<8x128xf32>
    %c0_14 = arith.constant 0 : index
    %c0_15 = arith.constant 0 : index
    %19 = vector.load %arg7[%c0_14, %c0_15] : memref<8x1xf32, #tpu.memory_space<vmem>>, vector<8x1xf32>
    %20 = vector.broadcast %19 : vector<8x1xf32> to vector<8x128xf32>
    %21 = arith.addf %18, %20 : vector<8x128xf32>
    %c0_16 = arith.constant 0 : index
    %c0_17 = arith.constant 0 : index
    %22 = vector.load %arg8[%c0_16, %c0_17] : memref<8x128xf32, #tpu.memory_space<vmem>>, vector<8x128xf32>
    tpu.vector_store %arg8[%c0_16, %c0_17], %21 {strides = array<i32>} : memref<8x128xf32, #tpu.memory_space<vmem>>, vector<8x128xf32>,
    return
  }
  func.func @transform_0(%arg0: i32) -> (i32, i32) {
    %c0_i32 = arith.constant 0 : i32
    %c0_i32_0 = arith.constant 0 : i32
    return %c0_i32, %arg0 : i32, i32
  }
  func.func @transform_1(%arg0: i32) -> (i32, i32) {
    %c0_i32 = arith.constant 0 : i32
    %c0_i32_0 = arith.constant 0 : i32
    %c0_i32_1 = arith.constant 0 : i32
    return %c0_i32, %c0_i32_0 : i32, i32
  }
  func.func @transform_2(%arg0: i32) -> (i32, i32) {
    %c0_i32 = arith.constant 0 : i32
    %c0_i32_0 = arith.constant 0 : i32
    %c0_i32_1 = arith.constant 0 : i32
    return %c0_i32, %c0_i32_0 : i32, i32
  }
  func.func @transform_3(%arg0: i32) -> (i32, i32) {
    %c0_i32 = arith.constant 0 : i32
    %c0_i32_0 = arith.constant 0 : i32
    %c0_i32_1 = arith.constant 0 : i32
    return %c0_i32, %c0_i32_0 : i32, i32
  }
  func.func @transform_4(%arg0: i32) -> (i32, i32) {
    %c0_i32 = arith.constant 0 : i32
    %c0_i32_0 = arith.constant 0 : i32
    %c0_i32_1 = arith.constant 0 : i32
    return %c0_i32, %c0_i32_0 : i32, i32
  }
  func.func @transform_5(%arg0: i32) -> (i32, i32) {
    %c0_i32 = arith.constant 0 : i32
    %c0_i32_0 = arith.constant 0 : i32
    %c0_i32_1 = arith.constant 0 : i32
    return %c0_i32, %c0_i32_0 : i32, i32
  }
  func.func @transform_6(%arg0: i32) -> (i32, i32) {
    %c0_i32 = arith.constant 0 : i32
    %c0_i32_0 = arith.constant 0 : i32
    %c0_i32_1 = arith.constant 0 : i32
    return %c0_i32, %c0_i32_0 : i32, i32
  }
  func.func @transform_7(%arg0: i32) -> (i32, i32) {
    %c0_i32 = arith.constant 0 : i32
    %c0_i32_0 = arith.constant 0 : i32
    return %c0_i32, %arg0 : i32, i32
  }
}

</mosaic_0001>

<llo_original>
// kernel: parameter_estimator_forward.1
$region0: #{parameter_estimator_forward.1}
  #allocation0 [shape = 'u32[]', space=smem, size = 0x4, offset = 0x4, fixed_abs, tag = 'smem constant byte address 0x4 - core index']
  #allocation1 [shape = 'u32[72,128]{1,0:T(1,128)}', space=vmem, size = 0x9000, scoped, tag = 'internal scratch']
  %s0 = inlined_call_operand.vmem [shape: f32[1,128], index: 0, kind: input, shape index: {}]
  %s1 = inlined_call_operand.vmem [shape: f32[128,1], index: 1, kind: input, shape index: {}]
  %s2 = inlined_call_operand.vmem [shape: f32[128,1], index: 2, kind: input, shape index: {}]
  %s3 = inlined_call_operand.vmem [shape: f32[128,128], index: 3, kind: input, shape index: {}]
  %s4 = inlined_call_operand.vmem [shape: f32[128,1], index: 4, kind: input, shape index: {}]
  %s5 = inlined_call_operand.vmem [shape: f32[8,128], index: 5, kind: input, shape index: {}]
  %s6 = inlined_call_operand.vmem [shape: f32[8,1], index: 6, kind: input, shape index: {}]
  %s7 = inlined_call_operand.vmem [shape: f32[8,128], index: 7, kind: output, shape index: {}]
  %s8 = sld [smem:[#allocation0]]
  $region38: #{parameter_estimator_forward.1} parent=0
    _
  %s10 = ssub.s32 1, %s8
  %s11 = scalar_select 0, %s10, %s8
  // Predicated region
  $region2: #{parameter_estimator_forward.1} parent=0 // pred_check
    _
  $region3: #{parameter_estimator_forward.1} parent=0 // pred_check_branch
    %13 = sbr.rel (0) target = $region5
  $region4: #{parameter_estimator_forward.1} parent=0 // pred_region
    _
  $region5: #{parameter_estimator_forward.1} parent=0 // pred_fallthru
    _
  // Predicated region
  $region6: #{parameter_estimator_forward.1} parent=0 // pred_check
    _
  $region7: #{parameter_estimator_forward.1} parent=0 // pred_check_branch
    %15 = sbr.rel (0) target = $region9
  $region8: #{parameter_estimator_forward.1} parent=0 // pred_region
    _
  $region9: #{parameter_estimator_forward.1} parent=0 // pred_fallthru
    _
  // Predicated region
  $region10: #{parameter_estimator_forward.1} parent=0 // pred_check
    _
  $region11: #{parameter_estimator_forward.1} parent=0 // pred_check_branch
    %17 = sbr.rel (0) target = $region13
  $region12: #{parameter_estimator_forward.1} parent=0 // pred_region
    _
  $region13: #{parameter_estimator_forward.1} parent=0 // pred_fallthru
    _
  // Predicated region
  $region14: #{parameter_estimator_forward.1} parent=0 // pred_check
    _
  $region15: #{parameter_estimator_forward.1} parent=0 // pred_check_branch
    %19 = sbr.rel (0) target = $region17
  $region16: #{parameter_estimator_forward.1} parent=0 // pred_region
    _
  $region17: #{parameter_estimator_forward.1} parent=0 // pred_fallthru
    _
  // Predicated region
  $region18: #{parameter_estimator_forward.1} parent=0 // pred_check
    _
  $region19: #{parameter_estimator_forward.1} parent=0 // pred_check_branch
    %21 = sbr.rel (0) target = $region21
  $region20: #{parameter_estimator_forward.1} parent=0 // pred_region
    _
  $region21: #{parameter_estimator_forward.1} parent=0 // pred_fallthru
    _
  // Predicated region
  $region22: #{parameter_estimator_forward.1} parent=0 // pred_check
    _
  $region23: #{parameter_estimator_forward.1} parent=0 // pred_check_branch
    %23 = sbr.rel (0) target = $region25
  $region24: #{parameter_estimator_forward.1} parent=0 // pred_region
    _
  $region25: #{parameter_estimator_forward.1} parent=0 // pred_fallthru
    _
  // Predicated region
  $region26: #{parameter_estimator_forward.1} parent=0 // pred_check
    _
  $region27: #{parameter_estimator_forward.1} parent=0 // pred_check_branch
    %25 = sbr.rel (0) target = $region29
  $region28: #{parameter_estimator_forward.1} parent=0 // pred_region
    _
  $region29: #{parameter_estimator_forward.1} parent=0 // pred_fallthru
    _
  %v26 = vld [vmem:[%s0] sm:$0x1]
  %v27 = vld [vmem:[%s1] sm:$0xff]
  %v28 = vld [vmem:[%s1 + $0x8] sm:$0xff]
  %v29 = vld [vmem:[%s1 + $0x10] sm:$0xff]
  %v30 = vld [vmem:[%s1 + $0x18] sm:$0xff]
  %v31 = vld [vmem:[%s1 + $0x20] sm:$0xff]
  %v32 = vld [vmem:[%s1 + $0x28] sm:$0xff]
  %v33 = vld [vmem:[%s1 + $0x30] sm:$0xff]
  %v34 = vld [vmem:[%s1 + $0x38] sm:$0xff]
  %v35 = vld [vmem:[%s1 + $0x40] sm:$0xff]
  %v36 = vld [vmem:[%s1 + $0x48] sm:$0xff]
  %v37 = vld [vmem:[%s1 + $0x50] sm:$0xff]
  %v38 = vld [vmem:[%s1 + $0x58] sm:$0xff]
  %v39 = vld [vmem:[%s1 + $0x60] sm:$0xff]
  %v40 = vld [vmem:[%s1 + $0x68] sm:$0xff]
  %v41 = vld [vmem:[%s1 + $0x70] sm:$0xff]
  %v42 = vld [vmem:[%s1 + $0x78] sm:$0xff]
  %44 = vset.pattern.permute.xlu0 0
  %45 = vperm.xlu0 %44, %v27
  %v46 = vpop.permute.xlu0 %45
  %49 = vset.pattern.permute.xlu0 0
  %50 = vperm.xlu0 %49, %v28
  %v51 = vpop.permute.xlu0 %50
  %54 = vset.pattern.permute.xlu0 0
  %55 = vperm.xlu0 %54, %v29
  %v56 = vpop.permute.xlu0 %55
  %59 = vset.pattern.permute.xlu0 0
  %60 = vperm.xlu0 %59, %v30
  %v61 = vpop.permute.xlu0 %60
  %64 = vset.pattern.permute.xlu0 0
  %65 = vperm.xlu0 %64, %v31
  %v66 = vpop.permute.xlu0 %65
  %69 = vset.pattern.permute.xlu0 0
  %70 = vperm.xlu0 %69, %v32
  %v71 = vpop.permute.xlu0 %70
  %74 = vset.pattern.permute.xlu0 0
  %75 = vperm.xlu0 %74, %v33
  %v76 = vpop.permute.xlu0 %75
  %79 = vset.pattern.permute.xlu0 0
  %80 = vperm.xlu0 %79, %v34
  %v81 = vpop.permute.xlu0 %80
  %84 = vset.pattern.permute.xlu0 0
  %85 = vperm.xlu0 %84, %v35
  %v86 = vpop.permute.xlu0 %85
  %89 = vset.pattern.permute.xlu0 0
  %90 = vperm.xlu0 %89, %v36
  %v91 = vpop.permute.xlu0 %90
  %94 = vset.pattern.permute.xlu0 0
  %95 = vperm.xlu0 %94, %v37
  %v96 = vpop.permute.xlu0 %95
  %99 = vset.pattern.permute.xlu0 0
  %100 = vperm.xlu0 %99, %v38
  %v101 = vpop.permute.xlu0 %100
  %104 = vset.pattern.permute.xlu0 0
  %105 = vperm.xlu0 %104, %v39
  %v106 = vpop.permute.xlu0 %105
  %109 = vset.pattern.permute.xlu0 0
  %110 = vperm.xlu0 %109, %v40
  %v111 = vpop.permute.xlu0 %110
  %114 = vset.pattern.permute.xlu0 0
  %115 = vperm.xlu0 %114, %v41
  %v116 = vpop.permute.xlu0 %115
  %119 = vset.pattern.permute.xlu0 0
  %120 = vperm.xlu0 %119, %v42
  %v121 = vpop.permute.xlu0 %120
  %v124 = vperm.slane %v26, 0
  %v126 = vmul.f32 %v46, %v124
  %v127 = vmul.f32 %v51, %v124
  %v128 = vmul.f32 %v56, %v124
  %v129 = vmul.f32 %v61, %v124
  %v130 = vmul.f32 %v66, %v124
  %v131 = vmul.f32 %v71, %v124
  %v132 = vmul.f32 %v76, %v124
  %v133 = vmul.f32 %v81, %v124
  %v134 = vmul.f32 %v86, %v124
  %v135 = vmul.f32 %v91, %v124
  %v136 = vmul.f32 %v96, %v124
  %v137 = vmul.f32 %v101, %v124
  %v138 = vmul.f32 %v106, %v124
  %v139 = vmul.f32 %v111, %v124
  %v140 = vmul.f32 %v116, %v124
  %v141 = vmul.f32 %v121, %v124
  %v142 = vld [vmem:[%s2] sm:$0xff]
  %v143 = vld [vmem:[%s2 + $0x8] sm:$0xff]
  %v144 = vld [vmem:[%s2 + $0x10] sm:$0xff]
  %v145 = vld [vmem:[%s2 + $0x18] sm:$0xff]
  %v146 = vld [vmem:[%s2 + $0x20] sm:$0xff]
  %v147 = vld [vmem:[%s2 + $0x28] sm:$0xff]
  %v148 = vld [vmem:[%s2 + $0x30] sm:$0xff]
  %v149 = vld [vmem:[%s2 + $0x38] sm:$0xff]
  %v150 = vld [vmem:[%s2 + $0x40] sm:$0xff]
  %v151 = vld [vmem:[%s2 + $0x48] sm:$0xff]
  %v152 = vld [vmem:[%s2 + $0x50] sm:$0xff]
  %v153 = vld [vmem:[%s2 + $0x58] sm:$0xff]
  %v154 = vld [vmem:[%s2 + $0x60] sm:$0xff]
  %v155 = vld [vmem:[%s2 + $0x68] sm:$0xff]
  %v156 = vld [vmem:[%s2 + $0x70] sm:$0xff]
  %v157 = vld [vmem:[%s2 + $0x78] sm:$0xff]
  %159 = vset.pattern.permute.xlu0 0
  %160 = vperm.xlu0 %159, %v142
  %v161 = vpop.permute.xlu0 %160
  %164 = vset.pattern.permute.xlu0 0
  %165 = vperm.xlu0 %164, %v143
  %v166 = vpop.permute.xlu0 %165
  %169 = vset.pattern.permute.xlu0 0
  %170 = vperm.xlu0 %169, %v144
  %v171 = vpop.permute.xlu0 %170
  %174 = vset.pattern.permute.xlu0 0
  %175 = vperm.xlu0 %174, %v145
  %v176 = vpop.permute.xlu0 %175
  %179 = vset.pattern.permute.xlu0 0
  %180 = vperm.xlu0 %179, %v146
  %v181 = vpop.permute.xlu0 %180
  %184 = vset.pattern.permute.xlu0 0
  %185 = vperm.xlu0 %184, %v147
  %v186 = vpop.permute.xlu0 %185
  %189 = vset.pattern.permute.xlu0 0
  %190 = vperm.xlu0 %189, %v148
  %v191 = vpop.permute.xlu0 %190
  %194 = vset.pattern.permute.xlu0 0
  %195 = vperm.xlu0 %194, %v149
  %v196 = vpop.permute.xlu0 %195
  %199 = vset.pattern.permute.xlu0 0
  %200 = vperm.xlu0 %199, %v150
  %v201 = vpop.permute.xlu0 %200
  %204 = vset.pattern.permute.xlu0 0
  %205 = vperm.xlu0 %204, %v151
  %v206 = vpop.permute.xlu0 %205
  %209 = vset.pattern.permute.xlu0 0
  %210 = vperm.xlu0 %209, %v152
  %v211 = vpop.permute.xlu0 %210
  %214 = vset.pattern.permute.xlu0 0
  %215 = vperm.xlu0 %214, %v153
  %v216 = vpop.permute.xlu0 %215
  %219 = vset.pattern.permute.xlu0 0
  %220 = vperm.xlu0 %219, %v154
  %v221 = vpop.permute.xlu0 %220
  %224 = vset.pattern.permute.xlu0 0
  %225 = vperm.xlu0 %224, %v155
  %v226 = vpop.permute.xlu0 %225
  %229 = vset.pattern.permute.xlu0 0
  %230 = vperm.xlu0 %229, %v156
  %v231 = vpop.permute.xlu0 %230
  %234 = vset.pattern.permute.xlu0 0
  %235 = vperm.xlu0 %234, %v157
  %v236 = vpop.permute.xlu0 %235
  %v238 = vadd.f32 %v126, %v161
  %v239 = vadd.f32 %v127, %v166
  %v240 = vadd.f32 %v128, %v171
  %v241 = vadd.f32 %v129, %v176
  %v242 = vadd.f32 %v130, %v181
  %v243 = vadd.f32 %v131, %v186
  %v244 = vadd.f32 %v132, %v191
  %v245 = vadd.f32 %v133, %v196
  %v246 = vadd.f32 %v134, %v201
  %v247 = vadd.f32 %v135, %v206
  %v248 = vadd.f32 %v136, %v211
  %v249 = vadd.f32 %v137, %v216
  %v250 = vadd.f32 %v138, %v221
  %v251 = vadd.f32 %v139, %v226
  %v252 = vadd.f32 %v140, %v231
  %v253 = vadd.f32 %v141, %v236
  %v254 = vmax.f32 %v238, 0.0
  %v255 = vmax.f32 %v239, 0.0
  %v256 = vmax.f32 %v240, 0.0
  %v257 = vmax.f32 %v241, 0.0
  %v258 = vmax.f32 %v242, 0.0
  %v259 = vmax.f32 %v243, 0.0
  %v260 = vmax.f32 %v244, 0.0
  %v261 = vmax.f32 %v245, 0.0
  %v262 = vmax.f32 %v246, 0.0
  %v263 = vmax.f32 %v247, 0.0
  %v264 = vmax.f32 %v248, 0.0
  %v265 = vmax.f32 %v249, 0.0
  %v266 = vmax.f32 %v250, 0.0
  %v267 = vmax.f32 %v251, 0.0
  %v268 = vmax.f32 %v252, 0.0
  %v269 = vmax.f32 %v253, 0.0
  %v270 = vld [vmem:[%s3] sm:$0xff]
  %v271 = vld [vmem:[%s3 + $0x8] sm:$0xff]
  %v272 = vld [vmem:[%s3 + $0x10] sm:$0xff]
  %v273 = vld [vmem:[%s3 + $0x18] sm:$0xff]
  %v274 = vld [vmem:[%s3 + $0x20] sm:$0xff]
  %v275 = vld [vmem:[%s3 + $0x28] sm:$0xff]
  %v276 = vld [vmem:[%s3 + $0x30] sm:$0xff]
  %v277 = vld [vmem:[%s3 + $0x38] sm:$0xff]
  %v278 = vld [vmem:[%s3 + $0x40] sm:$0xff]
  %v279 = vld [vmem:[%s3 + $0x48] sm:$0xff]
  %v280 = vld [vmem:[%s3 + $0x50] sm:$0xff]
  %v281 = vld [vmem:[%s3 + $0x58] sm:$0xff]
  %v282 = vld [vmem:[%s3 + $0x60] sm:$0xff]
  %v283 = vld [vmem:[%s3 + $0x68] sm:$0xff]
  %v284 = vld [vmem:[%s3 + $0x70] sm:$0xff]
  %v285 = vld [vmem:[%s3 + $0x78] sm:$0xff]
  %v286 = vld [vmem:[%s4] sm:$0xff]
  %v287 = vld [vmem:[%s4 + $0x8] sm:$0xff]
  %v288 = vld [vmem:[%s4 + $0x10] sm:$0xff]
  %v289 = vld [vmem:[%s4 + $0x18] sm:$0xff]
  %v290 = vld [vmem:[%s4 + $0x20] sm:$0xff]
  %v291 = vld [vmem:[%s4 + $0x28] sm:$0xff]
  %v292 = vld [vmem:[%s4 + $0x30] sm:$0xff]
  %v293 = vld [vmem:[%s4 + $0x38] sm:$0xff]
  %v294 = vld [vmem:[%s4 + $0x40] sm:$0xff]
  %v295 = vld [vmem:[%s4 + $0x48] sm:$0xff]
  %v296 = vld [vmem:[%s4 + $0x50] sm:$0xff]
  %v297 = vld [vmem:[%s4 + $0x58] sm:$0xff]
  %v298 = vld [vmem:[%s4 + $0x60] sm:$0xff]
  %v299 = vld [vmem:[%s4 + $0x68] sm:$0xff]
  %v300 = vld [vmem:[%s4 + $0x70] sm:$0xff]
  %v301 = vld [vmem:[%s4 + $0x78] sm:$0xff]
  %303 = vset.pattern.permute.xlu0 0
  %304 = vperm.xlu0 %303, %v286
  %v305 = vpop.permute.xlu0 %304
  %308 = vset.pattern.permute.xlu0 0
  %309 = vperm.xlu0 %308, %v287
  %v310 = vpop.permute.xlu0 %309
  %313 = vset.pattern.permute.xlu0 0
  %314 = vperm.xlu0 %313, %v288
  %v315 = vpop.permute.xlu0 %314
  %318 = vset.pattern.permute.xlu0 0
  %319 = vperm.xlu0 %318, %v289
  %v320 = vpop.permute.xlu0 %319
  %323 = vset.pattern.permute.xlu0 0
  %324 = vperm.xlu0 %323, %v290
  %v325 = vpop.permute.xlu0 %324
  %328 = vset.pattern.permute.xlu0 0
  %329 = vperm.xlu0 %328, %v291
  %v330 = vpop.permute.xlu0 %329
  %333 = vset.pattern.permute.xlu0 0
  %334 = vperm.xlu0 %333, %v292
  %v335 = vpop.permute.xlu0 %334
  %338 = vset.pattern.permute.xlu0 0
  %339 = vperm.xlu0 %338, %v293
  %v340 = vpop.permute.xlu0 %339
  %343 = vset.pattern.permute.xlu0 0
  %344 = vperm.xlu0 %343, %v294
  %v345 = vpop.permute.xlu0 %344
  %348 = vset.pattern.permute.xlu0 0
  %349 = vperm.xlu0 %348, %v295
  %v350 = vpop.permute.xlu0 %349
  %353 = vset.pattern.permute.xlu0 0
  %354 = vperm.xlu0 %353, %v296
  %v355 = vpop.permute.xlu0 %354
  %358 = vset.pattern.permute.xlu0 0
  %359 = vperm.xlu0 %358, %v297
  %v360 = vpop.permute.xlu0 %359
  %363 = vset.pattern.permute.xlu0 0
  %364 = vperm.xlu0 %363, %v298
  %v365 = vpop.permute.xlu0 %364
  %368 = vset.pattern.permute.xlu0 0
  %369 = vperm.xlu0 %368, %v299
  %v370 = vpop.permute.xlu0 %369
  %373 = vset.pattern.permute.xlu0 0
  %374 = vperm.xlu0 %373, %v300
  %v375 = vpop.permute.xlu0 %374
  %378 = vset.pattern.permute.xlu0 0
  %379 = vperm.xlu0 %378, %v301
  %v380 = vpop.permute.xlu0 %379
  %382 = vmatpush.msra.mxu0 %v269
  %383 = vmatpush.msra.mxu0 %v268
  %384 = vmatpush.msra.mxu0 %v267
  %385 = vmatpush.msra.mxu0 %v266
  %386 = vmatpush.msra.mxu0 %v265
  %387 = vmatpush.msra.mxu0 %v264
  %388 = vmatpush.msra.mxu0 %v263
  %389 = vmatpush.msra.mxu0 %v262
  %390 = vmatpush.msra.mxu0 %v261
  %391 = vmatpush.msra.mxu0 %v260
  %392 = vmatpush.msra.mxu0 %v259
  %393 = vmatpush.msra.mxu0 %v258
  %394 = vmatpush.msra.mxu0 %v257
  %395 = vmatpush.msra.mxu0 %v256
  %396 = vmatpush.msra.mxu0 %v255
  %397 = vmatpush.msra.mxu0 %v254
  %398 = vmatmul.f32.gmra.mxu0 %v270
  %v399 = vpop.f32.mrf.mxu0
  %v400 = vadd.f32 %v305, %v399
  %401 = vmatmul.f32.gmra.mxu0 %v271
  %v402 = vpop.f32.mrf.mxu0
  %v403 = vadd.f32 %v310, %v402
  %404 = vmatmul.f32.gmra.mxu0 %v272
  %v405 = vpop.f32.mrf.mxu0
  %v406 = vadd.f32 %v315, %v405
  %407 = vmatmul.f32.gmra.mxu0 %v273
  %v408 = vpop.f32.mrf.mxu0
  %v409 = vadd.f32 %v320, %v408
  %410 = vmatmul.f32.gmra.mxu0 %v274
  %v411 = vpop.f32.mrf.mxu0
  %v412 = vadd.f32 %v325, %v411
  %413 = vmatmul.f32.gmra.mxu0 %v275
  %v414 = vpop.f32.mrf.mxu0
  %v415 = vadd.f32 %v330, %v414
  %416 = vmatmul.f32.gmra.mxu0 %v276
  %v417 = vpop.f32.mrf.mxu0
  %v418 = vadd.f32 %v335, %v417
  %419 = vmatmul.f32.gmra.mxu0 %v277
  %v420 = vpop.f32.mrf.mxu0
  %v421 = vadd.f32 %v340, %v420
  %422 = vmatmul.f32.gmra.mxu0 %v278
  %v423 = vpop.f32.mrf.mxu0
  %v424 = vadd.f32 %v345, %v423
  %425 = vmatmul.f32.gmra.mxu0 %v279
  %v426 = vpop.f32.mrf.mxu0
  %v427 = vadd.f32 %v350, %v426
  %428 = vmatmul.f32.gmra.mxu0 %v280
  %v429 = vpop.f32.mrf.mxu0
  %v430 = vadd.f32 %v355, %v429
  %431 = vmatmul.f32.gmra.mxu0 %v281
  %v432 = vpop.f32.mrf.mxu0
  %v433 = vadd.f32 %v360, %v432
  %434 = vmatmul.f32.gmra.mxu0 %v282
  %v435 = vpop.f32.mrf.mxu0
  %v436 = vadd.f32 %v365, %v435
  %437 = vmatmul.f32.gmra.mxu0 %v283
  %v438 = vpop.f32.mrf.mxu0
  %v439 = vadd.f32 %v370, %v438
  %440 = vmatmul.f32.gmra.mxu0 %v284
  %v441 = vpop.f32.mrf.mxu0
  %v442 = vadd.f32 %v375, %v441
  %443 = vmatmul.f32.gmra.mxu0 %v285
  %v444 = vpop.f32.mrf.mxu0
  %v445 = vadd.f32 %v380, %v444
  %446 = vdwg.mxu0
  %v447 = vmax.f32 %v400, 0.0
  %v448 = vmax.f32 %v403, 0.0
  %v449 = vmax.f32 %v406, 0.0
  %v450 = vmax.f32 %v409, 0.0
  %v451 = vmax.f32 %v412, 0.0
  %v452 = vmax.f32 %v415, 0.0
  %v453 = vmax.f32 %v418, 0.0
  %v454 = vmax.f32 %v421, 0.0
  %v455 = vmax.f32 %v424, 0.0
  %v456 = vmax.f32 %v427, 0.0
  %v457 = vmax.f32 %v430, 0.0
  %v458 = vmax.f32 %v433, 0.0
  %v459 = vmax.f32 %v436, 0.0
  %v460 = vmax.f32 %v439, 0.0
  %v461 = vmax.f32 %v442, 0.0
  %v462 = vmax.f32 %v445, 0.0
  %v463 = vld [vmem:[%s5] sm:$0xff]
  %v464 = vld [vmem:[%s6] sm:$0xff]
  %466 = vset.pattern.permute.xlu0 0
  %467 = vperm.xlu0 %466, %v464
  %v468 = vpop.permute.xlu0 %467
  %470 = vmatpush.msra.mxu0 %v462
  %471 = vmatpush.msra.mxu0 %v461
  %472 = vmatpush.msra.mxu0 %v460
  %473 = vmatpush.msra.mxu0 %v459
  %474 = vmatpush.msra.mxu0 %v458
  %475 = vmatpush.msra.mxu0 %v457
  %476 = vmatpush.msra.mxu0 %v456
  %477 = vmatpush.msra.mxu0 %v455
  %478 = vmatpush.msra.mxu0 %v454
  %479 = vmatpush.msra.mxu0 %v453
  %480 = vmatpush.msra.mxu0 %v452
  %481 = vmatpush.msra.mxu0 %v451
  %482 = vmatpush.msra.mxu0 %v450
  %483 = vmatpush.msra.mxu0 %v449
  %484 = vmatpush.msra.mxu0 %v448
  %485 = vmatpush.msra.mxu0 %v447
  %486 = vmatmul.f32.gmra.mxu0 %v463
  %v487 = vpop.f32.mrf.mxu0
  %v488 = vadd.f32 %v468, %v487
  %489 = vdwg.mxu0
  %490 = vst [vmem:[%s7] sm:$0xff] %v488
  // Predicated region
  $region30: #{parameter_estimator_forward.1} parent=0 // pred_check
    _
  $region31: #{parameter_estimator_forward.1} parent=0 // pred_check_branch
    %492 = sbr.rel (0) target = $region33
  $region32: #{parameter_estimator_forward.1} parent=0 // pred_region
    _
  $region33: #{parameter_estimator_forward.1} parent=0 // pred_fallthru
    _
  // Predicated region
  $region34: #{parameter_estimator_forward.1} parent=0 // pred_check
    _
  $region35: #{parameter_estimator_forward.1} parent=0 // pred_check_branch
    %494 = sbr.rel (0) target = $region37
  $region36: #{parameter_estimator_forward.1} parent=0 // pred_region
    _
  $region37: #{parameter_estimator_forward.1} parent=0 // pred_fallthru
    _

</llo_original>
